<compile_context>
chip_gen: v5e
topology: v5e:2x2
jax: 0.10.0
libtpu: 0.0.40
codegen_flags: <defaults>
</compile_context>

<pallas_src>
import math
from functools import partial

import numpy as np
import jax
import jax.numpy as jnp
from jax.experimental import pallas as pl
from jax.experimental.pallas import tpu as pltpu


def _make_convblock_kernel(*, K, dilation, Wp, L_pad, Wo, M1,
                           activation, pooling, normalization, norm_type,
                           return_before_pooling,
                           negative_slope=0.01, eps=1e-5):
    """Build the per-image kernel body with static shape/config parameters."""

    def body(x_ref, w_ref, b_ref, s1_ref, *rest):
        rest = list(rest)
        s2_ref = rest.pop(0) if pooling else None
        o_ref = rest.pop(0)
        pre_ref = rest.pop(0) if return_before_pooling else None

        # ---- im2col with zero relayouts: each conv tap is an XLU lane-roll
        #      of the flattened image; the K*K taps are stacked on sublanes. --
        x = x_ref[0]                                           # (Cin_p, L_pad) f32
        taps = []
        for kh in range(K):
            for kw in range(K):
                off = (kh * Wp + kw) * dilation
                taps.append(x if off == 0
                            else pltpu.roll(x, shift=L_pad - off, axis=1))
        cols = jnp.concatenate(taps, axis=0).astype(jnp.bfloat16)  # (K*K*Cin_p, L_pad)

        # ---- single MXU contraction over all taps & channels (bf16 in,
        #      f32 accumulate), lane-dense result: spatial on the lane axis. --
        y_full = jnp.dot(w_ref[...], cols,
                         preferred_element_type=jnp.float32)       # (Cout, L_pad)

        # ---- compact the stride-1 "virtual" grid to the module's output grid
        #      with an exact 0/1 selection matmul (MXU gather). ----
        y = jnp.dot(y_full, s1_ref[...],
                    preferred_element_type=jnp.float32)            # (Cout, Ho*Wo)
        y = y + b_ref[...]                                         # conv bias (Cout,1)

        if normalization and norm_type == 'IN':
            # InstanceNorm2d(affine=False): per-sample/per-channel stats over
            # spatial == a lane-axis reduction in this layout; rsqrt -> EUP.
            mean = jnp.mean(y, axis=1, keepdims=True)
            var = jnp.mean(jnp.square(y - mean), axis=1, keepdims=True)
            y = (y - mean) * jax.lax.rsqrt(var + eps)
        # TODO(synk): norm_type='BN' needs cross-sample batch / running
        # statistics; the wrapper rejects it instead of silently skipping.

        if activation:                                             # LeakyReLU(0.01)
            y = jnp.where(y >= 0, y, negative_slope * y)

        if pre_ref is not None:
            pre_ref[0] = y.astype(pre_ref.dtype)

        if pooling:
            # 2x2 / stride-2 max pool: two lane-rolls bring the (i, j+1) and
            # (i+1, j / j+1) neighbours under each anchor, then a selection
            # matmul keeps only the even-index anchors (floor semantics).
            m = jnp.maximum(y, pltpu.roll(y, shift=M1 - 1, axis=1))
            m = jnp.maximum(m, pltpu.roll(m, shift=M1 - Wo, axis=1))
            y = jnp.dot(m, s2_ref[...],
                        preferred_element_type=jnp.float32)        # (Cout, M_out)

        o_ref[0] = y.astype(o_ref.dtype)

    return body


def conv_block_forward(x_nchw, weight, bias, *, kernel, stride=1, padding=1,
                       dilation=1, normalization=False, norm_type='BN',
                       pooling=False, activation=True,
                       return_before_pooling=False):
    """Pallas ConvBlock forward. x_nchw: (N, Cin, H, W). Returns NCHW output."""
    N, Cin, H, W = x_nchw.shape
    Cout = weight.shape[0]
    K = kernel

    if normalization and norm_type not in ('BN', 'IN'):
        raise NotImplementedError(norm_type)
    if normalization and norm_type == 'BN':
        # TODO(synk): BatchNorm2d requires cross-sample batch statistics
        # (train) / running stats (eval); not expressible per-sample here.
        raise NotImplementedError("norm_type='BN' is not supported by the Pallas kernel")

    Hp, Wp = H + 2 * padding, W + 2 * padding
    Ho = (Hp - dilation * (K - 1) - 1) // stride + 1
    Wo = (Wp - dilation * (K - 1) - 1) // stride + 1
    Ho_out, Wo_out = (Ho // 2, Wo // 2) if pooling else (Ho, Wo)
    M1 = Ho * Wo                    # module conv-output grid, flattened
    M_out = Ho_out * Wo_out         # final (possibly pooled) grid, flattened

    Cin_p = ((Cin + 7) // 8) * 8    # pad channels to a full sublane tile
    KKCp = K * K * Cin_p
    # Flattened padded image + tail so every tap's window fits, rounded up to
    # a multiple of 128 so all lane ops (rolls, matmul rhs) are unpadded.
    L_in = Hp * Wp + (K - 1) * dilation
    L_pad = ((L_in + 127) // 128) * 128

    # ---- glue: NCHW + replicate padding -> flat (N, Cin_p, L_pad), f32 ----
    xp = jnp.pad(x_nchw.astype(jnp.float32),
                 ((0, 0), (0, 0), (padding, padding), (padding, padding)),
                 mode='edge')
    if Cin_p > Cin:
        xp = jnp.pad(xp, ((0, 0), (0, Cin_p - Cin), (0, 0), (0, 0)))
    xf = xp.reshape(N, Cin_p, Hp * Wp)
    xf = jnp.pad(xf, ((0, 0), (0, 0), (0, L_pad - Hp * Wp)))

    # ---- weights as a lane-dense 2-D bf16 slab (Cout, K*K*Cin_p) ----
    wt = jnp.transpose(weight, (0, 2, 3, 1))                 # (Cout, K, K, Cin)
    if Cin_p > Cin:
        wt = jnp.pad(wt, ((0, 0), (0, 0), (0, 0), (0, Cin_p - Cin)))
    w_slab = wt.reshape(Cout, KKCp).astype(jnp.bfloat16)
    b2 = bias.reshape(Cout, 1).astype(jnp.float32)

    # ---- static 0/1 selection matrices (constants; the MXU does the gather) --
    s1 = np.zeros((L_pad, M1), np.float32)          # stride-1 grid -> module grid
    for i in range(Ho):
        for j in range(Wo):
            s1[(i * stride) * Wp + j * stride, i * Wo + j] = 1.0
    s1 = jnp.asarray(s1)
    if pooling:
        s2 = np.zeros((M1, M_out), np.float32)      # 2x2-pool anchor selection
        for i in range(Ho_out):
            for j in range(Wo_out):
                s2[(2 * i) * Wo + 2 * j, i * Wo_out + j] = 1.0
        s2 = jnp.asarray(s2)

    body = _make_convblock_kernel(
        K=K, dilation=dilation, Wp=Wp, L_pad=L_pad, Wo=Wo, M1=M1,
        activation=activation, pooling=pooling, normalization=normalization,
        norm_type=norm_type, return_before_pooling=return_before_pooling)

    in_specs = [
        pl.BlockSpec((1, Cin_p, L_pad), lambda n: (n, 0, 0)),
        pl.BlockSpec((Cout, KKCp), lambda n: (0, 0)),
        pl.BlockSpec((Cout, 1), lambda n: (0, 0)),
        pl.BlockSpec((L_pad, M1), lambda n: (0, 0)),
    ]
    inputs = [xf, w_slab, b2, s1]
    if pooling:
        in_specs.append(pl.BlockSpec((M1, M_out), lambda n: (0, 0)))
        inputs.append(s2)

    out_shape = [jax.ShapeDtypeStruct((N, Cout, M_out), x_nchw.dtype)]
    out_specs = [pl.BlockSpec((1, Cout, M_out), lambda n: (n, 0, 0))]
    if return_before_pooling:
        out_shape.append(jax.ShapeDtypeStruct((N, Cout, M1), x_nchw.dtype))
        out_specs.append(pl.BlockSpec((1, Cout, M1), lambda n: (n, 0, 0)))

    res = pl.pallas_call(
        body,
        out_shape=out_shape,
        grid_spec=pltpu.PrefetchScalarGridSpec(
            num_scalar_prefetch=0,
            grid=(N,),
            in_specs=in_specs,
            out_specs=out_specs,
        ),
        compiler_params=pltpu.CompilerParams(
            dimension_semantics=("parallel",)),  # N>=2 keeps both v7x TCs busy
    )(*inputs)

    out = res[0].reshape(N, Cout, Ho_out, Wo_out)     # NCHW-native: reshape only
    if return_before_pooling:
        return out, res[1].reshape(N, Cout, Ho, Wo)
    return out


def _reference_forward(x, weight, bias, *, kernel, stride=1, padding=1,
                       dilation=1, activation=True, pooling=False,
                       normalization=False, norm_type='BN'):
    """Pure-JAX f32 mirror of the PyTorch ConvBlock forward (default settings)."""
    del kernel
    xp = jnp.pad(x, ((0, 0), (0, 0), (padding, padding), (padding, padding)),
                 mode='edge')
    y = jax.lax.conv_general_dilated(
        xp, weight, window_strides=(stride, stride), padding='VALID',
        rhs_dilation=(dilation, dilation),
        dimension_numbers=('NCHW', 'OIHW', 'NCHW'))
    y = y + bias.reshape(1, -1, 1, 1)
    if normalization and norm_type == 'IN':
        mean = jnp.mean(y, axis=(2, 3), keepdims=True)
        var = jnp.mean(jnp.square(y - mean), axis=(2, 3), keepdims=True)
        y = (y - mean) * jax.lax.rsqrt(var + 1e-5)
    if activation:
        y = jnp.where(y >= 0, y, 0.01 * y)
    if pooling:
        n, c, h, w = y.shape
        y = y[:, :, :(h // 2) * 2, :(w // 2) * 2]
        y = y.reshape(n, c, h // 2, 2, w // 2, 2).max(axis=5).max(axis=3)
    return y


if __name__ == "__main__":
    # Module config: kernel=3, in_depth=4, conv_depth=8, stride=1, padding=1.
    K, Cin, Cout = 3, 4, 8
    N, H, W = 2, 16, 16

    key = jax.random.PRNGKey(0)
    kx, kw = jax.random.split(key)
    x = jax.random.normal(kx, (N, Cin, H, W), dtype=jnp.float32)

    # kaiming_normal_ (fan_in, leaky_relu a=0 -> gain=sqrt(2)); bias zeros.
    fan_in = Cin * K * K
    std = math.sqrt(2.0 / fan_in)
    weight = jax.random.normal(kw, (Cout, Cin, K, K), dtype=jnp.float32) * std
    bias = jnp.zeros((Cout,), dtype=jnp.float32)

    configs = [
        # (a) LeakyReLU + 2x2 max-pool (the original test config)
        dict(kernel=K, stride=1, padding=1, dilation=1, activation=True,
             pooling=True, normalization=False, norm_type='BN'),
        # (b) InstanceNorm + LeakyReLU, no pooling
        dict(kernel=K, stride=1, padding=1, dilation=1, activation=True,
             pooling=False, normalization=True, norm_type='IN'),
    ]

    for cfg in configs:
        out = jax.jit(partial(conv_block_forward, **cfg))(x, weight, bias)
        out = jax.block_until_ready(out)
        ref = _reference_forward(x, weight, bias, **cfg)
        assert out.shape == ref.shape, (out.shape, ref.shape)
        # The kernel feeds the MXU bf16 inputs (per the perf review) with f32
        # accumulation, so compare against the f32 reference with a
        # correspondingly relaxed tolerance.
        err = float(jnp.max(jnp.abs(out - ref)))
        assert jnp.allclose(out, ref, atol=5e-2, rtol=5e-2), err

    print("KERNEL_OK")
</pallas_src>

<mosaic_0001>
module attributes {stable_mosaic.version = 11 : i64} {
  func.func @body(%arg0: i32, %arg1: memref<1x8x384xf32, #tpu.memory_space<vmem>>, %arg2: memref<8x72xbf16, #tpu.memory_space<vmem>>, %arg3: memref<8x1xf32, #tpu.memory_space<vmem>>, %arg4: memref<384x256xf32, #tpu.memory_space<vmem>>, %arg5: memref<256x64xf32, #tpu.memory_space<vmem>>, %arg6: memref<1x8x64xf32, #tpu.memory_space<vmem>>) attributes {dimension_semantics = [#tpu.dimension_semantics<parallel>], iteration_bounds = array<i64: 2>, scalar_prefetch = 0 : i64, scratch_operands = 0 : i64, tpu.core_type = #tpu.core_type<tc>, window_params = [{transform_indices = @transform_0, window_bounds = array<i64: 1, 8, 384>}, {pipeline_mode = #tpu.pipeline_mode<synchronous>, transform_indices = @transform_1, window_bounds = array<i64: 8, 72>}, {pipeline_mode = #tpu.pipeline_mode<synchronous>, transform_indices = @transform_2, window_bounds = array<i64: 8, 1>}, {pipeline_mode = #tpu.pipeline_mode<synchronous>, transform_indices = @transform_3, window_bounds = array<i64: 384, 256>}, {pipeline_mode = #tpu.pipeline_mode<synchronous>, transform_indices = @transform_4, window_bounds = array<i64: 256, 64>}, {transform_indices = @transform_5, window_bounds = array<i64: 1, 8, 64>}]} {
    %c0 = arith.constant 0 : index
    %c0_0 = arith.constant 0 : index
    %c0_1 = arith.constant 0 : index
    %0 = vector.load %arg1[%c0, %c0_0, %c0_1] : memref<1x8x384xf32, #tpu.memory_space<vmem>>, vector<1x8x384xf32>
    %1 = vector.shape_cast %0 : vector<1x8x384xf32> to vector<8x384xf32>
    %c383_i32 = arith.constant 383 : i32
    %2 = tpu.dynamic_rotate %1 by %c383_i32 dim 1 : vector<8x384xf32>, i32 -> vector<8x384xf32>
    %c382_i32 = arith.constant 382 : i32
    %3 = tpu.dynamic_rotate %1 by %c382_i32 dim 1 : vector<8x384xf32>, i32 -> vector<8x384xf32>
    %c366_i32 = arith.constant 366 : i32
    %4 = tpu.dynamic_rotate %1 by %c366_i32 dim 1 : vector<8x384xf32>, i32 -> vector<8x384xf32>
    %c365_i32 = arith.constant 365 : i32
    %5 = tpu.dynamic_rotate %1 by %c365_i32 dim 1 : vector<8x384xf32>, i32 -> vector<8x384xf32>
    %c364_i32 = arith.constant 364 : i32
    %6 = tpu.dynamic_rotate %1 by %c364_i32 dim 1 : vector<8x384xf32>, i32 -> vector<8x384xf32>
    %c348_i32 = arith.constant 348 : i32
    %7 = tpu.dynamic_rotate %1 by %c348_i32 dim 1 : vector<8x384xf32>, i32 -> vector<8x384xf32>
    %c347_i32 = arith.constant 347 : i32
    %8 = tpu.dynamic_rotate %1 by %c347_i32 dim 1 : vector<8x384xf32>, i32 -> vector<8x384xf32>
    %c346_i32 = arith.constant 346 : i32
    %9 = tpu.dynamic_rotate %1 by %c346_i32 dim 1 : vector<8x384xf32>, i32 -> vector<8x384xf32>
    %10 = tpu.concatenate %1, %2, %3, %4, %5, %6, %7, %8, %9 in 0 : vector<8x384xf32>, vector<8x384xf32>, vector<8x384xf32>, vector<8x384xf32>, vector<8x384xf32>, vector<8x384xf32>, vector<8x384xf32>, vector<8x384xf32>, vector<8x384xf32> -> vector<72x384xf32>
    %11 = arith.truncf %10 : vector<72x384xf32> to vector<72x384xbf16>
    %c0_2 = arith.constant 0 : index
    %c0_3 = arith.constant 0 : index
    %12 = vector.load %arg2[%c0_2, %c0_3] : memref<8x72xbf16, #tpu.memory_space<vmem>>, vector<8x72xbf16>
    %cst = arith.constant dense<0.000000e+00> : vector<8x384xf32>
    %13 = tpu.matmul %12, %11, %cst {dimension_numbers = #tpu.dot_dimension_numbers<[1], [0], [0], [1], [0, 0, 1, 1], [], []>} : vector<8x72xbf16>, vector<72x384xbf16>, vector<8x384xf32> -> vector<8x384xf32>
    %c0_4 = arith.constant 0 : index
    %c0_5 = arith.constant 0 : index
    %14 = vector.load %arg4[%c0_4, %c0_5] : memref<384x256xf32, #tpu.memory_space<vmem>>, vector<384x256xf32>
    %cst_6 = arith.constant dense<0.000000e+00> : vector<8x256xf32>
    %15 = tpu.matmul %13, %14, %cst_6 {dimension_numbers = #tpu.dot_dimension_numbers<[1], [0], [0], [1], [0, 0, 1, 1], [], []>} : vector<8x384xf32>, vector<384x256xf32>, vector<8x256xf32> -> vector<8x256xf32>
    %c0_7 = arith.constant 0 : index
    %c0_8 = arith.constant 0 : index
    %16 = vector.load %arg3[%c0_7, %c0_8] : memref<8x1xf32, #tpu.memory_space<vmem>>, vector<8x1xf32>
    %17 = vector.broadcast %16 : vector<8x1xf32> to vector<8x256xf32>
    %18 = arith.addf %15, %17 : vector<8x256xf32>
    %cst_9 = arith.constant 0.000000e+00 : f32
    %19 = vector.broadcast %cst_9 : f32 to vector<8x256xf32>
    %20 = arith.cmpf oge, %18, %19 : vector<8x256xf32>
    %cst_10 = arith.constant 0.00999999977 : f32
    %21 = vector.broadcast %cst_10 : f32 to vector<8x256xf32>
    %22 = arith.mulf %21, %18 : vector<8x256xf32>
    %23 = arith.select %20, %18, %22 : vector<8x256xi1>, vector<8x256xf32>
    %c255_i32 = arith.constant 255 : i32
    %24 = tpu.dynamic_rotate %23 by %c255_i32 dim 1 : vector<8x256xf32>, i32 -> vector<8x256xf32>
    %25 = arith.maximumf %23, %24 : vector<8x256xf32>
    %c240_i32 = arith.constant 240 : i32
    %26 = tpu.dynamic_rotate %25 by %c240_i32 dim 1 : vector<8x256xf32>, i32 -> vector<8x256xf32>
    %27 = arith.maximumf %25, %26 : vector<8x256xf32>
    %c0_11 = arith.constant 0 : index
    %c0_12 = arith.constant 0 : index
    %28 = vector.load %arg5[%c0_11, %c0_12] : memref<256x64xf32, #tpu.memory_space<vmem>>, vector<256x64xf32>
    %cst_13 = arith.constant dense<0.000000e+00> : vector<8x64xf32>
    %29 = tpu.matmul %27, %28, %cst_13 {dimension_numbers = #tpu.dot_dimension_numbers<[1], [0], [0], [1], [0, 0, 1, 1], [], []>} : vector<8x256xf32>, vector<256x64xf32>, vector<8x64xf32> -> vector<8x64xf32>
    %c0_14 = arith.constant 0 : index
    %c0_15 = arith.constant 0 : index
    %c0_16 = arith.constant 0 : index
    %30 = vector.load %arg6[%c0_14, %c0_15, %c0_16] : memref<1x8x64xf32, #tpu.memory_space<vmem>>, vector<1x8x64xf32>
    %31 = vector.shape_cast %30 : vector<1x8x64xf32> to vector<8x64xf32>
    %32 = vector.shape_cast %29 : vector<8x64xf32> to vector<1x8x64xf32>
    tpu.vector_store %arg6[%c0_14, %c0_15, %c0_16], %32 {strides = array<i32>} : memref<1x8x64xf32, #tpu.memory_space<vmem>>, vector<1x8x64xf32>,
    return
  }
  func.func @transform_0(%arg0: i32) -> (i32, i32, i32) {
    %c0_i32 = arith.constant 0 : i32
    %c0_i32_0 = arith.constant 0 : i32
    %c0_i32_1 = arith.constant 0 : i32
    return %arg0, %c0_i32, %c0_i32_0 : i32, i32, i32
  }
  func.func @transform_1(%arg0: i32) -> (i32, i32) {
    %c0_i32 = arith.constant 0 : i32
    %c0_i32_0 = arith.constant 0 : i32
    %c0_i32_1 = arith.constant 0 : i32
    return %c0_i32, %c0_i32_0 : i32, i32
  }
  func.func @transform_2(%arg0: i32) -> (i32, i32) {
    %c0_i32 = arith.constant 0 : i32
    %c0_i32_0 = arith.constant 0 : i32
    %c0_i32_1 = arith.constant 0 : i32
    return %c0_i32, %c0_i32_0 : i32, i32
  }
  func.func @transform_3(%arg0: i32) -> (i32, i32) {
    %c0_i32 = arith.constant 0 : i32
    %c0_i32_0 = arith.constant 0 : i32
    %c0_i32_1 = arith.constant 0 : i32
    return %c0_i32, %c0_i32_0 : i32, i32
  }
  func.func @transform_4(%arg0: i32) -> (i32, i32) {
    %c0_i32 = arith.constant 0 : i32
    %c0_i32_0 = arith.constant 0 : i32
    %c0_i32_1 = arith.constant 0 : i32
    return %c0_i32, %c0_i32_0 : i32, i32
  }
  func.func @transform_5(%arg0: i32) -> (i32, i32, i32) {
    %c0_i32 = arith.constant 0 : i32
    %c0_i32_0 = arith.constant 0 : i32
    %c0_i32_1 = arith.constant 0 : i32
    return %arg0, %c0_i32, %c0_i32_0 : i32, i32, i32
  }
}

</mosaic_0001>

<llo_original>
// kernel: conv_block_forward.1
$region0: #{conv_block_forward.1}
  #allocation0 [shape = 'u32[]', space=smem, size = 0x4, offset = 0x4, fixed_abs, tag = 'smem constant byte address 0x4 - core index']
  #allocation1 [shape = 'u32[72,128]{1,0:T(1,128)}', space=vmem, size = 0x9000, scoped, tag = 'internal scratch']
  %s0 = inlined_call_operand.vmem [shape: f32[2,8,384], index: 0, kind: input, shape index: {}]
  %s1 = inlined_call_operand.vmem [shape: bf16[8,72], index: 1, kind: input, shape index: {}]
  %s2 = inlined_call_operand.vmem [shape: f32[8,1], index: 2, kind: input, shape index: {}]
  %s3 = inlined_call_operand.vmem [shape: f32[384,256], index: 3, kind: input, shape index: {}]
  %s4 = inlined_call_operand.vmem [shape: f32[256,64], index: 4, kind: input, shape index: {}]
  %s5 = inlined_call_operand.vmem [shape: f32[2,8,64], index: 5, kind: output, shape index: {}]
  %s6 = sld [smem:[#allocation0]]
  $region53: #{conv_block_forward.1} parent=0
    _
  %s8 = ssub.s32 1, %s6
  %s9 = scalar_select 0, %s8, %s6
  loop: start=0, step=1, limit=4
  $region2: #{conv_block_forward.1} parent=0 // loop_pre_header
    _
  $region3: #{conv_block_forward.1} parent=0 // loop_header
    %s11 = sphi 0, %s15
    %p12 = scmp.ge.s32.totalorder %s11, 4
    %s21 = sphi 0, %s23
    %s24 = sphi 0, %s21
    %s25 = sphi 0, %s24
    %s41 = sphi 0, %s25
    %s45 = sphi 0, %s45
    %s47 = sphi 0, %s45
    %s48 = sphi 0, %s47
    %s62 = sphi 0, %s48
    %s66 = sphi 0, %s66
    %s68 = sphi 0, %s66
    %s69 = sphi 0, %s68
    %s83 = sphi 0, %s69
    %s87 = sphi 0, %s87
    %s89 = sphi 0, %s87
    %s90 = sphi 0, %s89
    %s104 = sphi 0, %s90
    %s108 = sphi 0, %s108
    %s110 = sphi 0, %s108
    %s111 = sphi 0, %s110
    %s125 = sphi 0, %s111
    %s131 = sphi 0, %s133
    %s134 = sphi 0, %s131
    %s135 = sphi 0, %s134
    %s151 = sphi 0, %s135
  $region4: #{conv_block_forward.1} parent=0 // loop_header_branch
    %14 = sbr.rel (%p12) target = $region8
  $region5: #{conv_block_forward.1} parent=0 // loop_body
    %s16 = ssub.s32 %s11, 1
    %s17 = ssub.s32 %s11, 2
    %s18 = sadd.s32 %s11, 1
    %s19 = ssub.s32 %s11, %s18
    %p20 = scmp.eq.s32.totalorder %s19, 0
    %s22 = sadd.s32 %s21, 1
    %s23 = scalar_select %p20, %s21, %s22
    %p26 = pneg %p20
    %p27 = scmp.eq.s32.totalorder %s11, 1
    %p28 = por %p26, %p27
    %p29 = scmp.ne.s32.totalorder %s21, %s24
    %p30 = scmp.eq.s32.totalorder %s11, 0
    %p31 = por %p29, %p30
    %p32 = scmp.ne.s32.totalorder %s21, %s24
    %p33 = scmp.eq.s32.totalorder %s16, 1
    %p34 = por %p32, %p33
    %p35 = scmp.ne.s32.totalorder %s24, %s25
    %p36 = scmp.eq.s32.totalorder %s16, 0
    %p37 = por %p35, %p36
    %p38 = scmp.ne.s32.totalorder %s24, %s25
    %p39 = scmp.eq.s32.totalorder %s17, 1
    %p40 = por %p38, %p39
    %p42 = scmp.ne.s32.totalorder %s25, %s41
    %p43 = scmp.eq.s32.totalorder %s17, 0
    %p44 = por %p42, %p43
    %s46 = sadd.s32 %s45, 1
    %p49 = scmp.eq.s32.totalorder %s11, 1
    %p50 = scmp.ne.s32.totalorder %s45, %s47
    %p51 = scmp.eq.s32.totalorder %s11, 0
    %p52 = por %p50, %p51
    %p53 = scmp.ne.s32.totalorder %s45, %s47
    %p54 = scmp.eq.s32.totalorder %s16, 1
    %p55 = por %p53, %p54
    %p56 = scmp.ne.s32.totalorder %s47, %s48
    %p57 = scmp.eq.s32.totalorder %s16, 0
    %p58 = por %p56, %p57
    %p59 = scmp.ne.s32.totalorder %s47, %s48
    %p60 = scmp.eq.s32.totalorder %s17, 1
    %p61 = por %p59, %p60
    %p63 = scmp.ne.s32.totalorder %s48, %s62
    %p64 = scmp.eq.s32.totalorder %s17, 0
    %p65 = por %p63, %p64
    %s67 = sadd.s32 %s66, 1
    %p70 = scmp.eq.s32.totalorder %s11, 1
    %p71 = scmp.ne.s32.totalorder %s66, %s68
    %p72 = scmp.eq.s32.totalorder %s11, 0
    %p73 = por %p71, %p72
    %p74 = scmp.ne.s32.totalorder %s66, %s68
    %p75 = scmp.eq.s32.totalorder %s16, 1
    %p76 = por %p74, %p75
    %p77 = scmp.ne.s32.totalorder %s68, %s69
    %p78 = scmp.eq.s32.totalorder %s16, 0
    %p79 = por %p77, %p78
    %p80 = scmp.ne.s32.totalorder %s68, %s69
    %p81 = scmp.eq.s32.totalorder %s17, 1
    %p82 = por %p80, %p81
    %p84 = scmp.ne.s32.totalorder %s69, %s83
    %p85 = scmp.eq.s32.totalorder %s17, 0
    %p86 = por %p84, %p85
    %s88 = sadd.s32 %s87, 1
    %p91 = scmp.eq.s32.totalorder %s11, 1
    %p92 = scmp.ne.s32.totalorder %s87, %s89
    %p93 = scmp.eq.s32.totalorder %s11, 0
    %p94 = por %p92, %p93
    %p95 = scmp.ne.s32.totalorder %s87, %s89
    %p96 = scmp.eq.s32.totalorder %s16, 1
    %p97 = por %p95, %p96
    %p98 = scmp.ne.s32.totalorder %s89, %s90
    %p99 = scmp.eq.s32.totalorder %s16, 0
    %p100 = por %p98, %p99
    %p101 = scmp.ne.s32.totalorder %s89, %s90
    %p102 = scmp.eq.s32.totalorder %s17, 1
    %p103 = por %p101, %p102
    %p105 = scmp.ne.s32.totalorder %s90, %s104
    %p106 = scmp.eq.s32.totalorder %s17, 0
    %p107 = por %p105, %p106
    %s109 = sadd.s32 %s108, 1
    %p112 = scmp.eq.s32.totalorder %s11, 1
    %p113 = scmp.ne.s32.totalorder %s108, %s110
    %p114 = scmp.eq.s32.totalorder %s11, 0
    %p115 = por %p113, %p114
    %p116 = scmp.ne.s32.totalorder %s108, %s110
    %p117 = scmp.eq.s32.totalorder %s16, 1
    %p118 = por %p116, %p117
    %p119 = scmp.ne.s32.totalorder %s110, %s111
    %p120 = scmp.eq.s32.totalorder %s16, 0
    %p121 = por %p119, %p120
    %p122 = scmp.ne.s32.totalorder %s110, %s111
    %p123 = scmp.eq.s32.totalorder %s17, 1
    %p124 = por %p122, %p123
    %p126 = scmp.ne.s32.totalorder %s111, %s125
    %p127 = scmp.eq.s32.totalorder %s17, 0
    %p128 = por %p126, %p127
    %s129 = ssub.s32 %s11, %s18
    %p130 = scmp.eq.s32.totalorder %s129, 0
    %s132 = sadd.s32 %s131, 1
    %s133 = scalar_select %p130, %s131, %s132
    %p136 = pneg %p130
    %p137 = scmp.eq.s32.totalorder %s11, 1
    %p138 = por %p136, %p137
    %p139 = scmp.ne.s32.totalorder %s131, %s134
    %p140 = scmp.eq.s32.totalorder %s11, 0
    %p141 = por %p139, %p140
    %p142 = scmp.ne.s32.totalorder %s131, %s134
    %p143 = scmp.eq.s32.totalorder %s16, 1
    %p144 = por %p142, %p143
    %p145 = scmp.ne.s32.totalorder %s134, %s135
    %p146 = scmp.eq.s32.totalorder %s16, 0
    %p147 = por %p145, %p146
    %p148 = scmp.ne.s32.totalorder %s134, %s135
    %p149 = scmp.eq.s32.totalorder %s17, 1
    %p150 = por %p148, %p149
    %p152 = scmp.ne.s32.totalorder %s135, %s151
    %p153 = scmp.eq.s32.totalorder %s17, 0
    %p154 = por %p152, %p153
    %p155 = scmp.le.s32.totalorder 1, %s11
    %p156 = scmp.lt.s32.totalorder %s11, 3
    %p157 = pnand %p155, %p156
    %p158 = pneg %p157
    // Predicated region
    $region9: #{conv_block_forward.1} parent=5 // pred_check
      _
    $region10: #{conv_block_forward.1} parent=5 // pred_check_branch
      %160 = sbr.rel (%p157) target = $region12
    $region11: #{conv_block_forward.1} parent=5 // pred_region
      %s161 = ssub.s32 %s11, 1
      // Predicated region
      $region13: #{conv_block_forward.1} parent=11 // pred_check
        %p162 = pneg %p58
      $region14: #{conv_block_forward.1} parent=11 // pred_check_branch
        %164 = sbr.rel (%p162) target = $region16
      $region15: #{conv_block_forward.1} parent=11 // pred_region
        _
      $region16: #{conv_block_forward.1} parent=11 // pred_fallthru
        _
      // Predicated region
      $region17: #{conv_block_forward.1} parent=11 // pred_check
        %p165 = pneg %p79
      $region18: #{conv_block_forward.1} parent=11 // pred_check_branch
        %167 = sbr.rel (%p165) target = $region20
      $region19: #{conv_block_forward.1} parent=11 // pred_region
        _
      $region20: #{conv_block_forward.1} parent=11 // pred_fallthru
        _
      // Predicated region
      $region21: #{conv_block_forward.1} parent=11 // pred_check
        %p168 = pneg %p100
      $region22: #{conv_block_forward.1} parent=11 // pred_check_branch
        %170 = sbr.rel (%p168) target = $region24
      $region23: #{conv_block_forward.1} parent=11 // pred_region
        _
      $region24: #{conv_block_forward.1} parent=11 // pred_fallthru
        _
      // Predicated region
      $region25: #{conv_block_forward.1} parent=11 // pred_check
        %p171 = pneg %p121
      $region26: #{conv_block_forward.1} parent=11 // pred_check_branch
        %173 = sbr.rel (%p171) target = $region28
      $region27: #{conv_block_forward.1} parent=11 // pred_region
        _
      $region28: #{conv_block_forward.1} parent=11 // pred_fallthru
        _
    $region12: #{conv_block_forward.1} parent=5 // pred_fallthru
      _
    %p174 = scmp.lt.s32.totalorder %s11, 2
    // Predicated region
    $region29: #{conv_block_forward.1} parent=5 // pred_check
      %p175 = pneg %p174
    $region30: #{conv_block_forward.1} parent=5 // pred_check_branch
      %177 = sbr.rel (%p175) target = $region32
    $region31: #{conv_block_forward.1} parent=5 // pred_region
      // Predicated region
      $region33: #{conv_block_forward.1} parent=31 // pred_check
        %p178 = pneg %p31
      $region34: #{conv_block_forward.1} parent=31 // pred_check_branch
        %180 = sbr.rel (%p178) target = $region36
      $region35: #{conv_block_forward.1} parent=31 // pred_region
        %p181 = scmp.lt.s32.totalorder %s11, 1
        %s182 = scalar_select %p181, %s11, 1
        %s183 = smul.addr %s182, 3
        %s184 = smul.addr %s183, 8
        %s185 = scalar_lea.vmem %s0, %s184
      $region36: #{conv_block_forward.1} parent=31 // pred_fallthru
        _
    $region32: #{conv_block_forward.1} parent=5 // pred_fallthru
      _
    %p186 = scmp.le.s32.totalorder 1, %s11
    %p187 = scmp.lt.s32.totalorder %s11, 3
    %p188 = pnand %p186, %p187
    %p189 = pneg %p188
    // Predicated region
    $region37: #{conv_block_forward.1} parent=5 // pred_check
      _
    $region38: #{conv_block_forward.1} parent=5 // pred_check_branch
      %191 = sbr.rel (%p188) target = $region40
    $region39: #{conv_block_forward.1} parent=5 // pred_region
      %s192 = ssub.s32 %s11, 1
      %p193 = scmp.lt.s32.totalorder %s16, 1
      %s194 = scalar_select %p193, %s16, 1
      %s195 = smul.addr %s194, 3
      %s196 = smul.addr %s195, 8
      %s197 = scalar_lea.vmem %s0, %s196
      %p198 = pneg %p37
      %p199 = pneg %p34
      %p200 = pneg %p58
      %p201 = pneg %p55
      %p202 = pneg %p79
      %p203 = pneg %p76
      %p204 = pneg %p100
      %p205 = pneg %p97
      %p206 = pneg %p121
      %p207 = pneg %p118
      %p208 = pneg %p147
      %p209 = pneg %p144
      %p210 = scmp.lt.s32.totalorder %s16, 1
      %s211 = scalar_select %p210, %s16, 1
      %s212 = smul.addr %s211, 8
      %s213 = scalar_lea.vmem %s5, %s212
      %p214 = scmp.lt.s32.totalorder %s16, 1
      %s215 = scalar_select %p214, %s16, 1
      %s216 = smul.addr %s215, 3
      %s217 = smul.addr %s216, 8
      %s218 = scalar_lea.vmem %s0, %s217
      %p219 = scmp.lt.s32.totalorder %s16, 1
      %s220 = scalar_select %p219, %s16, 1
      %s221 = smul.addr %s220, 8
      %s222 = scalar_lea.vmem %s5, %s221
      %v224 = vld [vmem:[%s218] sm:$0xff]
      %v225 = vld [vmem:[%s218 + $0x8] sm:$0xff]
      %v226 = vld [vmem:[%s218 + $0x10] sm:$0xff]
      %227 = vrot.lane.b32.xlu0 %v224, 127
      %v228 = vpop.permute.xlu0 %227
      %229 = vrot.lane.b32.xlu0 %v225, 127
      %v230 = vpop.permute.xlu0 %229
      %231 = vrot.lane.b32.xlu0 %v226, 127
      %v232 = vpop.permute.xlu0 %231
      %v233 = vlaneseq
      %v234 = vand.u32 %v233, 127
      %vm235 = vcmp.lt.s32.totalorder %v234, 127
      %v236 = vsel %vm235, %v230, %v232
      %v237 = vsel %vm235, %v228, %v230
      %v238 = vsel %vm235, %v232, %v228
      %239 = vrot.lane.b32.xlu0 %v224, 126
      %v240 = vpop.permute.xlu0 %239
      %241 = vrot.lane.b32.xlu0 %v225, 126
      %v242 = vpop.permute.xlu0 %241
      %243 = vrot.lane.b32.xlu0 %v226, 126
      %v244 = vpop.permute.xlu0 %243
      %vm245 = vcmp.lt.s32.totalorder %v234, 126
      %v246 = vsel %vm245, %v242, %v244
      %v247 = vsel %vm245, %v240, %v242
      %v248 = vsel %vm245, %v244, %v240
      %249 = vrot.lane.b32.xlu0 %v224, 110
      %v250 = vpop.permute.xlu0 %249
      %251 = vrot.lane.b32.xlu0 %v225, 110
      %v252 = vpop.permute.xlu0 %251
      %253 = vrot.lane.b32.xlu0 %v226, 110
      %v254 = vpop.permute.xlu0 %253
      %vm255 = vcmp.lt.s32.totalorder %v234, 110
      %v256 = vsel %vm255, %v252, %v254
      %v257 = vsel %vm255, %v250, %v252
      %v258 = vsel %vm255, %v254, %v250
      %259 = vrot.lane.b32.xlu0 %v224, 109
      %v260 = vpop.permute.xlu0 %259
      %261 = vrot.lane.b32.xlu0 %v225, 109
      %v262 = vpop.permute.xlu0 %261
      %263 = vrot.lane.b32.xlu0 %v226, 109
      %v264 = vpop.permute.xlu0 %263
      %vm265 = vcmp.lt.s32.totalorder %v234, 109
      %v266 = vsel %vm265, %v262, %v264
      %v267 = vsel %vm265, %v260, %v262
      %v268 = vsel %vm265, %v264, %v260
      %269 = vrot.lane.b32.xlu0 %v224, 108
      %v270 = vpop.permute.xlu0 %269
      %271 = vrot.lane.b32.xlu0 %v225, 108
      %v272 = vpop.permute.xlu0 %271
      %273 = vrot.lane.b32.xlu0 %v226, 108
      %v274 = vpop.permute.xlu0 %273
      %vm275 = vcmp.lt.s32.totalorder %v234, 108
      %v276 = vsel %vm275, %v272, %v274
      %v277 = vsel %vm275, %v270, %v272
      %v278 = vsel %vm275, %v274, %v270
      %279 = vrot.lane.b32.xlu0 %v224, 92
      %v280 = vpop.permute.xlu0 %279
      %281 = vrot.lane.b32.xlu0 %v225, 92
      %v282 = vpop.permute.xlu0 %281
      %283 = vrot.lane.b32.xlu0 %v226, 92
      %v284 = vpop.permute.xlu0 %283
      %vm285 = vcmp.lt.s32.totalorder %v234, 92
      %v286 = vsel %vm285, %v282, %v284
      %v287 = vsel %vm285, %v280, %v282
      %v288 = vsel %vm285, %v284, %v280
      %289 = vrot.lane.b32.xlu0 %v224, 91
      %v290 = vpop.permute.xlu0 %289
      %291 = vrot.lane.b32.xlu0 %v225, 91
      %v292 = vpop.permute.xlu0 %291
      %293 = vrot.lane.b32.xlu0 %v226, 91
      %v294 = vpop.permute.xlu0 %293
      %vm295 = vcmp.lt.s32.totalorder %v234, 91
      %v296 = vsel %vm295, %v292, %v294
      %v297 = vsel %vm295, %v290, %v292
      %v298 = vsel %vm295, %v294, %v290
      %299 = vrot.lane.b32.xlu0 %v224, 90
      %v300 = vpop.permute.xlu0 %299
      %301 = vrot.lane.b32.xlu0 %v225, 90
      %v302 = vpop.permute.xlu0 %301
      %303 = vrot.lane.b32.xlu0 %v226, 90
      %v304 = vpop.permute.xlu0 %303
      %vm305 = vcmp.lt.s32.totalorder %v234, 90
      %v306 = vsel %vm305, %v302, %v304
      %v307 = vsel %vm305, %v300, %v302
      %v308 = vsel %vm305, %v304, %v300
      %v309 = vpack.c.bf16 %v237, %v224
      %v310 = vpack.c.bf16 %v236, %v225
      %v311 = vpack.c.bf16 %v238, %v226
      %v312 = vpack.c.bf16 %v257, %v247
      %v313 = vpack.c.bf16 %v256, %v246
      %v314 = vpack.c.bf16 %v258, %v248
      %v315 = vpack.c.bf16 %v277, %v267
      %v316 = vpack.c.bf16 %v276, %v266
      %v317 = vpack.c.bf16 %v278, %v268
      %v318 = vpack.c.bf16 %v297, %v287
      %v319 = vpack.c.bf16 %v296, %v286
      %v320 = vpack.c.bf16 %v298, %v288
      %v321 = vpack.c.bf16 %v307, %v307
      %v322 = vpack.c.bf16 %v306, %v306
      %v323 = vpack.c.bf16 %v308, %v308
      %v324 = vld [vmem:[%s1] sm:$0xf]
      %vm325 = vcmask 588800
      %v327 = vsel %vm325, %v324, 0
      %vm329 = vcmask 1043456
      %v331 = vsel %vm329, %v321, 0
      %v334 = vsel %vm329, %v322, 0
      %v337 = vsel %vm329, %v323, 0
      %339 = vmatpush.bf16.msra.mxu0 0
      %340 = vmatpush.bf16.msra.mxu0 0
      %341 = vmatpush.bf16.msra.mxu0 0
      %342 = vmatpush.bf16.msra.mxu0 %v331
      %343 = vmatpush.bf16.msra.mxu0 %v318
      %344 = vmatpush.bf16.msra.mxu0 %v315
      %345 = vmatpush.bf16.msra.mxu0 %v312
      %346 = vmatpush.bf16.msra.mxu0 %v309
      %347 = vmatmul.bf16.gmra.mxu0 %v327
      %v348 = vpop.f32.mrf.mxu0
      %v349 = vadd.f32 0.0, %v348
      %v350 = vpop.f32.mrf.mxu0
      %351 = vdwg.mxu0
      %352 = vmatpush.bf16.msra.mxu0 0
      %353 = vmatpush.bf16.msra.mxu0 0
      %354 = vmatpush.bf16.msra.mxu0 0
      %355 = vmatpush.bf16.msra.mxu0 %v334
      %356 = vmatpush.bf16.msra.mxu0 %v319
      %357 = vmatpush.bf16.msra.mxu0 %v316
      %358 = vmatpush.bf16.msra.mxu0 %v313
      %359 = vmatpush.bf16.msra.mxu0 %v310
      %360 = vmatmul.bf16.gmra.mxu0 %v327
      %v361 = vpop.f32.mrf.mxu0
      %v362 = vadd.f32 0.0, %v361
      %v363 = vpop.f32.mrf.mxu0
      %364 = vdwg.mxu0
      %365 = vmatpush.bf16.msra.mxu0 0
      %366 = vmatpush.bf16.msra.mxu0 0
      %367 = vmatpush.bf16.msra.mxu0 0
      %368 = vmatpush.bf16.msra.mxu0 %v337
      %369 = vmatpush.bf16.msra.mxu0 %v320
      %370 = vmatpush.bf16.msra.mxu0 %v317
      %371 = vmatpush.bf16.msra.mxu0 %v314
      %372 = vmatpush.bf16.msra.mxu0 %v311
      %373 = vmatmul.bf16.gmra.mxu0 %v327
      %v374 = vpop.f32.mrf.mxu0
      %v375 = vadd.f32 0.0, %v374
      %v376 = vpop.f32.mrf.mxu0
      %377 = vdwg.mxu0
      %v378 = vld [vmem:[%s3] sm:$0xff]
      %v379 = vld [vmem:[%s3 + $0x8] sm:$0xff]
      %v380 = vld [vmem:[%s3 + $0x10] sm:$0xff]
      %v381 = vld [vmem:[%s3 + $0x18] sm:$0xff]
      %v382 = vld [vmem:[%s3 + $0x20] sm:$0xff]
      %v383 = vld [vmem:[%s3 + $0x28] sm:$0xff]
      %v384 = vld [vmem:[%s3 + $0x30] sm:$0xff]
      %v385 = vld [vmem:[%s3 + $0x38] sm:$0xff]
      %v386 = vld [vmem:[%s3 + $0x40] sm:$0xff]
      %v387 = vld [vmem:[%s3 + $0x48] sm:$0xff]
      %v388 = vld [vmem:[%s3 + $0x50] sm:$0xff]
      %v389 = vld [vmem:[%s3 + $0x58] sm:$0xff]
      %v390 = vld [vmem:[%s3 + $0x60] sm:$0xff]
      %v391 = vld [vmem:[%s3 + $0x68] sm:$0xff]
      %v392 = vld [vmem:[%s3 + $0x70] sm:$0xff]
      %v393 = vld [vmem:[%s3 + $0x78] sm:$0xff]
      %v394 = vld [vmem:[%s3 + $0x80] sm:$0xff]
      %v395 = vld [vmem:[%s3 + $0x88] sm:$0xff]
      %v396 = vld [vmem:[%s3 + $0x90] sm:$0xff]
      %v397 = vld [vmem:[%s3 + $0x98] sm:$0xff]
      %v398 = vld [vmem:[%s3 + $0xa0] sm:$0xff]
      %v399 = vld [vmem:[%s3 + $0xa8] sm:$0xff]
      %v400 = vld [vmem:[%s3 + $0xb0] sm:$0xff]
      %v401 = vld [vmem:[%s3 + $0xb8] sm:$0xff]
      %v402 = vld [vmem:[%s3 + $0xc0] sm:$0xff]
      %v403 = vld [vmem:[%s3 + $0xc8] sm:$0xff]
      %v404 = vld [vmem:[%s3 + $0xd0] sm:$0xff]
      %v405 = vld [vmem:[%s3 + $0xd8] sm:$0xff]
      %v406 = vld [vmem:[%s3 + $0xe0] sm:$0xff]
      %v407 = vld [vmem:[%s3 + $0xe8] sm:$0xff]
      %v408 = vld [vmem:[%s3 + $0xf0] sm:$0xff]
      %v409 = vld [vmem:[%s3 + $0xf8] sm:$0xff]
      %v410 = vld [vmem:[%s3 + $0x100] sm:$0xff]
      %v411 = vld [vmem:[%s3 + $0x108] sm:$0xff]
      %v412 = vld [vmem:[%s3 + $0x110] sm:$0xff]
      %v413 = vld [vmem:[%s3 + $0x118] sm:$0xff]
      %v414 = vld [vmem:[%s3 + $0x120] sm:$0xff]
      %v415 = vld [vmem:[%s3 + $0x128] sm:$0xff]
      %v416 = vld [vmem:[%s3 + $0x130] sm:$0xff]
      %v417 = vld [vmem:[%s3 + $0x138] sm:$0xff]
      %v418 = vld [vmem:[%s3 + $0x140] sm:$0xff]
      %v419 = vld [vmem:[%s3 + $0x148] sm:$0xff]
      %v420 = vld [vmem:[%s3 + $0x150] sm:$0xff]
      %v421 = vld [vmem:[%s3 + $0x158] sm:$0xff]
      %v422 = vld [vmem:[%s3 + $0x160] sm:$0xff]
      %v423 = vld [vmem:[%s3 + $0x168] sm:$0xff]
      %v424 = vld [vmem:[%s3 + $0x170] sm:$0xff]
      %v425 = vld [vmem:[%s3 + $0x178] sm:$0xff]
      %v426 = vld [vmem:[%s3 + $0x180] sm:$0xff]
      %v427 = vld [vmem:[%s3 + $0x188] sm:$0xff]
      %v428 = vld [vmem:[%s3 + $0x190] sm:$0xff]
      %v429 = vld [vmem:[%s3 + $0x198] sm:$0xff]
      %v430 = vld [vmem:[%s3 + $0x1a0] sm:$0xff]
      %v431 = vld [vmem:[%s3 + $0x1a8] sm:$0xff]
      %v432 = vld [vmem:[%s3 + $0x1b0] sm:$0xff]
      %v433 = vld [vmem:[%s3 + $0x1b8] sm:$0xff]
      %v434 = vld [vmem:[%s3 + $0x1c0] sm:$0xff]
      %v435 = vld [vmem:[%s3 + $0x1c8] sm:$0xff]
      %v436 = vld [vmem:[%s3 + $0x1d0] sm:$0xff]
      %v437 = vld [vmem:[%s3 + $0x1d8] sm:$0xff]
      %v438 = vld [vmem:[%s3 + $0x1e0] sm:$0xff]
      %v439 = vld [vmem:[%s3 + $0x1e8] sm:$0xff]
      %v440 = vld [vmem:[%s3 + $0x1f0] sm:$0xff]
      %v441 = vld [vmem:[%s3 + $0x1f8] sm:$0xff]
      %v442 = vld [vmem:[%s3 + $0x200] sm:$0xff]
      %v443 = vld [vmem:[%s3 + $0x208] sm:$0xff]
      %v444 = vld [vmem:[%s3 + $0x210] sm:$0xff]
      %v445 = vld [vmem:[%s3 + $0x218] sm:$0xff]
      %v446 = vld [vmem:[%s3 + $0x220] sm:$0xff]
      %v447 = vld [vmem:[%s3 + $0x228] sm:$0xff]
      %v448 = vld [vmem:[%s3 + $0x230] sm:$0xff]
      %v449 = vld [vmem:[%s3 + $0x238] sm:$0xff]
      %v450 = vld [vmem:[%s3 + $0x240] sm:$0xff]
      %v451 = vld [vmem:[%s3 + $0x248] sm:$0xff]
      %v452 = vld [vmem:[%s3 + $0x250] sm:$0xff]
      %v453 = vld [vmem:[%s3 + $0x258] sm:$0xff]
      %v454 = vld [vmem:[%s3 + $0x260] sm:$0xff]
      %v455 = vld [vmem:[%s3 + $0x268] sm:$0xff]
      %v456 = vld [vmem:[%s3 + $0x270] sm:$0xff]
      %v457 = vld [vmem:[%s3 + $0x278] sm:$0xff]
      %v458 = vld [vmem:[%s3 + $0x280] sm:$0xff]
      %v459 = vld [vmem:[%s3 + $0x288] sm:$0xff]
      %v460 = vld [vmem:[%s3 + $0x290] sm:$0xff]
      %v461 = vld [vmem:[%s3 + $0x298] sm:$0xff]
      %v462 = vld [vmem:[%s3 + $0x2a0] sm:$0xff]
      %v463 = vld [vmem:[%s3 + $0x2a8] sm:$0xff]
      %v464 = vld [vmem:[%s3 + $0x2b0] sm:$0xff]
      %v465 = vld [vmem:[%s3 + $0x2b8] sm:$0xff]
      %v466 = vld [vmem:[%s3 + $0x2c0] sm:$0xff]
      %v467 = vld [vmem:[%s3 + $0x2c8] sm:$0xff]
      %v468 = vld [vmem:[%s3 + $0x2d0] sm:$0xff]
      %v469 = vld [vmem:[%s3 + $0x2d8] sm:$0xff]
      %v470 = vld [vmem:[%s3 + $0x2e0] sm:$0xff]
      %v471 = vld [vmem:[%s3 + $0x2e8] sm:$0xff]
      %v472 = vld [vmem:[%s3 + $0x2f0] sm:$0xff]
      %v473 = vld [vmem:[%s3 + $0x2f8] sm:$0xff]
      %v474 = vld [vmem:[%s2] sm:$0xff]
      %476 = vset.pattern.permute.xlu0 0
      %477 = vperm.xlu0 %476, %v474
      %v478 = vpop.permute.xlu0 %477
      %480 = vmatpush.msra.mxu0 %v408
      %481 = vmatpush.msra.mxu0 %v406
      %482 = vmatpush.msra.mxu0 %v404
      %483 = vmatpush.msra.mxu0 %v402
      %484 = vmatpush.msra.mxu0 %v400
      %485 = vmatpush.msra.mxu0 %v398
      %486 = vmatpush.msra.mxu0 %v396
      %487 = vmatpush.msra.mxu0 %v394
      %488 = vmatpush.msra.mxu0 %v392
      %489 = vmatpush.msra.mxu0 %v390
      %490 = vmatpush.msra.mxu0 %v388
      %491 = vmatpush.msra.mxu0 %v386
      %492 = vmatpush.msra.mxu0 %v384
      %493 = vmatpush.msra.mxu0 %v382
      %494 = vmatpush.msra.mxu0 %v380
      %495 = vmatpush.msra.mxu0 %v378
      %496 = vmatmul.f32.gmra.mxu0 %v349
      %v497 = vpop.f32.mrf.mxu0
      %v498 = vadd.f32 %v478, %v497
      %499 = vdwg.mxu0
      %500 = vmatpush.msra.mxu0 %v440
      %501 = vmatpush.msra.mxu0 %v438
      %502 = vmatpush.msra.mxu0 %v436
      %503 = vmatpush.msra.mxu0 %v434
      %504 = vmatpush.msra.mxu0 %v432
      %505 = vmatpush.msra.mxu0 %v430
      %506 = vmatpush.msra.mxu0 %v428
      %507 = vmatpush.msra.mxu0 %v426
      %508 = vmatpush.msra.mxu0 %v424
      %509 = vmatpush.msra.mxu0 %v422
      %510 = vmatpush.msra.mxu0 %v420
      %511 = vmatpush.msra.mxu0 %v418
      %512 = vmatpush.msra.mxu0 %v416
      %513 = vmatpush.msra.mxu0 %v414
      %514 = vmatpush.msra.mxu0 %v412
      %515 = vmatpush.msra.mxu0 %v410
      %516 = vmatmul.f32.gmra.mxu0 %v362
      %v517 = vpop.f32.mrf.mxu0
      %v518 = vadd.f32 %v498, %v517
      %519 = vdwg.mxu0
      %520 = vmatpush.msra.mxu0 %v472
      %521 = vmatpush.msra.mxu0 %v470
      %522 = vmatpush.msra.mxu0 %v468
      %523 = vmatpush.msra.mxu0 %v466
      %524 = vmatpush.msra.mxu0 %v464
      %525 = vmatpush.msra.mxu0 %v462
      %526 = vmatpush.msra.mxu0 %v460
      %527 = vmatpush.msra.mxu0 %v458
      %528 = vmatpush.msra.mxu0 %v456
      %529 = vmatpush.msra.mxu0 %v454
      %530 = vmatpush.msra.mxu0 %v452
      %531 = vmatpush.msra.mxu0 %v450
      %532 = vmatpush.msra.mxu0 %v448
      %533 = vmatpush.msra.mxu0 %v446
      %534 = vmatpush.msra.mxu0 %v444
      %535 = vmatpush.msra.mxu0 %v442
      %536 = vmatmul.f32.gmra.mxu0 %v375
      %v537 = vpop.f32.mrf.mxu0
      %v538 = vadd.f32 %v518, %v537
      %539 = vdwg.mxu0
      %540 = vmatpush.msra.mxu0 %v409
      %541 = vmatpush.msra.mxu0 %v407
      %542 = vmatpush.msra.mxu0 %v405
      %543 = vmatpush.msra.mxu0 %v403
      %544 = vmatpush.msra.mxu0 %v401
      %545 = vmatpush.msra.mxu0 %v399
      %546 = vmatpush.msra.mxu0 %v397
      %547 = vmatpush.msra.mxu0 %v395
      %548 = vmatpush.msra.mxu0 %v393
      %549 = vmatpush.msra.mxu0 %v391
      %550 = vmatpush.msra.mxu0 %v389
      %551 = vmatpush.msra.mxu0 %v387
      %552 = vmatpush.msra.mxu0 %v385
      %553 = vmatpush.msra.mxu0 %v383
      %554 = vmatpush.msra.mxu0 %v381
      %555 = vmatpush.msra.mxu0 %v379
      %556 = vmatmul.f32.gmra.mxu0 %v349
      %v557 = vpop.f32.mrf.mxu0
      %v558 = vadd.f32 %v478, %v557
      %559 = vdwg.mxu0
      %560 = vmatpush.msra.mxu0 %v441
      %561 = vmatpush.msra.mxu0 %v439
      %562 = vmatpush.msra.mxu0 %v437
      %563 = vmatpush.msra.mxu0 %v435
      %564 = vmatpush.msra.mxu0 %v433
      %565 = vmatpush.msra.mxu0 %v431
      %566 = vmatpush.msra.mxu0 %v429
      %567 = vmatpush.msra.mxu0 %v427
      %568 = vmatpush.msra.mxu0 %v425
      %569 = vmatpush.msra.mxu0 %v423
      %570 = vmatpush.msra.mxu0 %v421
      %571 = vmatpush.msra.mxu0 %v419
      %572 = vmatpush.msra.mxu0 %v417
      %573 = vmatpush.msra.mxu0 %v415
      %574 = vmatpush.msra.mxu0 %v413
      %575 = vmatpush.msra.mxu0 %v411
      %576 = vmatmul.f32.gmra.mxu0 %v362
      %v577 = vpop.f32.mrf.mxu0
      %v578 = vadd.f32 %v558, %v577
      %579 = vdwg.mxu0
      %580 = vmatpush.msra.mxu0 %v473
      %581 = vmatpush.msra.mxu0 %v471
      %582 = vmatpush.msra.mxu0 %v469
      %583 = vmatpush.msra.mxu0 %v467
      %584 = vmatpush.msra.mxu0 %v465
      %585 = vmatpush.msra.mxu0 %v463
      %586 = vmatpush.msra.mxu0 %v461
      %587 = vmatpush.msra.mxu0 %v459
      %588 = vmatpush.msra.mxu0 %v457
      %589 = vmatpush.msra.mxu0 %v455
      %590 = vmatpush.msra.mxu0 %v453
      %591 = vmatpush.msra.mxu0 %v451
      %592 = vmatpush.msra.mxu0 %v449
      %593 = vmatpush.msra.mxu0 %v447
      %594 = vmatpush.msra.mxu0 %v445
      %595 = vmatpush.msra.mxu0 %v443
      %596 = vmatmul.f32.gmra.mxu0 %v375
      %v597 = vpop.f32.mrf.mxu0
      %v598 = vadd.f32 %v578, %v597
      %599 = vdwg.mxu0
      %vm600 = vcmp.ge.f32.partialorder %v538, 0.0
      %vm601 = vcmp.ge.f32.partialorder %v598, 0.0
      %v602 = vmul.f32 %v538, 0.01
      %v603 = vmul.f32 %v598, 0.01
      %v604 = vsel %vm600, %v538, %v602
      %v605 = vsel %vm601, %v598, %v603
      %606 = vrot.lane.b32.xlu0 %v604, 127
      %v607 = vpop.permute.xlu0 %606
      %608 = vrot.lane.b32.xlu0 %v605, 127
      %v609 = vpop.permute.xlu0 %608
      %v610 = vsel %vm235, %v607, %v609
      %v611 = vsel %vm235, %v609, %v607
      %v612 = vmax.f32 %v604, %v610
      %v613 = vmax.f32 %v605, %v611
      %614 = vrot.lane.b32.xlu0 %v612, 112
      %v615 = vpop.permute.xlu0 %614
      %616 = vrot.lane.b32.xlu0 %v613, 112
      %v617 = vpop.permute.xlu0 %616
      %vm618 = vcmp.lt.s32.totalorder %v234, 112
      %v619 = vsel %vm618, %v615, %v617
      %v620 = vsel %vm618, %v617, %v615
      %v621 = vmax.f32 %v612, %v619
      %v622 = vmax.f32 %v613, %v620
      %v623 = vld [vmem:[%s4] sm:$0xff]
      %v624 = vld [vmem:[%s4 + $0x8] sm:$0xff]
      %v625 = vld [vmem:[%s4 + $0x10] sm:$0xff]
      %v626 = vld [vmem:[%s4 + $0x18] sm:$0xff]
      %v627 = vld [vmem:[%s4 + $0x20] sm:$0xff]
      %v628 = vld [vmem:[%s4 + $0x28] sm:$0xff]
      %v629 = vld [vmem:[%s4 + $0x30] sm:$0xff]
      %v630 = vld [vmem:[%s4 + $0x38] sm:$0xff]
      %v631 = vld [vmem:[%s4 + $0x40] sm:$0xff]
      %v632 = vld [vmem:[%s4 + $0x48] sm:$0xff]
      %v633 = vld [vmem:[%s4 + $0x50] sm:$0xff]
      %v634 = vld [vmem:[%s4 + $0x58] sm:$0xff]
      %v635 = vld [vmem:[%s4 + $0x60] sm:$0xff]
      %v636 = vld [vmem:[%s4 + $0x68] sm:$0xff]
      %v637 = vld [vmem:[%s4 + $0x70] sm:$0xff]
      %v638 = vld [vmem:[%s4 + $0x78] sm:$0xff]
      %v639 = vld [vmem:[%s4 + $0x80] sm:$0xff]
      %v640 = vld [vmem:[%s4 + $0x88] sm:$0xff]
      %v641 = vld [vmem:[%s4 + $0x90] sm:$0xff]
      %v642 = vld [vmem:[%s4 + $0x98] sm:$0xff]
      %v643 = vld [vmem:[%s4 + $0xa0] sm:$0xff]
      %v644 = vld [vmem:[%s4 + $0xa8] sm:$0xff]
      %v645 = vld [vmem:[%s4 + $0xb0] sm:$0xff]
      %v646 = vld [vmem:[%s4 + $0xb8] sm:$0xff]
      %v647 = vld [vmem:[%s4 + $0xc0] sm:$0xff]
      %v648 = vld [vmem:[%s4 + $0xc8] sm:$0xff]
      %v649 = vld [vmem:[%s4 + $0xd0] sm:$0xff]
      %v650 = vld [vmem:[%s4 + $0xd8] sm:$0xff]
      %v651 = vld [vmem:[%s4 + $0xe0] sm:$0xff]
      %v652 = vld [vmem:[%s4 + $0xe8] sm:$0xff]
      %v653 = vld [vmem:[%s4 + $0xf0] sm:$0xff]
      %v654 = vld [vmem:[%s4 + $0xf8] sm:$0xff]
      %655 = vmatpush.msra.mxu0 %v638
      %656 = vmatpush.msra.mxu0 %v637
      %657 = vmatpush.msra.mxu0 %v636
      %658 = vmatpush.msra.mxu0 %v635
      %659 = vmatpush.msra.mxu0 %v634
      %660 = vmatpush.msra.mxu0 %v633
      %661 = vmatpush.msra.mxu0 %v632
      %662 = vmatpush.msra.mxu0 %v631
      %663 = vmatpush.msra.mxu0 %v630
      %664 = vmatpush.msra.mxu0 %v629
      %665 = vmatpush.msra.mxu0 %v628
      %666 = vmatpush.msra.mxu0 %v627
      %667 = vmatpush.msra.mxu0 %v626
      %668 = vmatpush.msra.mxu0 %v625
      %669 = vmatpush.msra.mxu0 %v624
      %670 = vmatpush.msra.mxu0 %v623
      %671 = vmatmul.f32.gmra.mxu0 %v621
      %v672 = vpop.f32.mrf.mxu0
      %v673 = vadd.f32 0.0, %v672
      %674 = vdwg.mxu0
      %675 = vmatpush.msra.mxu0 %v654
      %676 = vmatpush.msra.mxu0 %v653
      %677 = vmatpush.msra.mxu0 %v652
      %678 = vmatpush.msra.mxu0 %v651
      %679 = vmatpush.msra.mxu0 %v650
      %680 = vmatpush.msra.mxu0 %v649
      %681 = vmatpush.msra.mxu0 %v648
      %682 = vmatpush.msra.mxu0 %v647
      %683 = vmatpush.msra.mxu0 %v646
      %684 = vmatpush.msra.mxu0 %v645
      %685 = vmatpush.msra.mxu0 %v644
      %686 = vmatpush.msra.mxu0 %v643
      %687 = vmatpush.msra.mxu0 %v642
      %688 = vmatpush.msra.mxu0 %v641
      %689 = vmatpush.msra.mxu0 %v640
      %690 = vmatpush.msra.mxu0 %v639
      %691 = vmatmul.f32.gmra.mxu0 %v622
      %v692 = vpop.f32.mrf.mxu0
      %v693 = vadd.f32 %v673, %v692
      %694 = vdwg.mxu0
      %vm695 = vcmask 523264
      %696 = vst.msk [vmem:[%s222] sm:$0xff] %vm695, %v693
      %p697 = scmp.lt.s32.totalorder %s16, 1
      %s698 = scalar_select %p697, %s16, 1
      %s699 = smul.addr %s698, 8
      %s700 = scalar_lea.vmem %s5, %s699
      // Predicated region
      $region41: #{conv_block_forward.1} parent=39 // pred_check
        %p701 = pneg %p144
      $region42: #{conv_block_forward.1} parent=39 // pred_check_branch
        %703 = sbr.rel (%p701) target = $region44
      $region43: #{conv_block_forward.1} parent=39 // pred_region
        _
      $region44: #{conv_block_forward.1} parent=39 // pred_fallthru
        _
    $region40: #{conv_block_forward.1} parent=5 // pred_fallthru
      _
    %p704 = scmp.le.s32.totalorder 2, %s11
    // Predicated region
    $region45: #{conv_block_forward.1} parent=5 // pred_check
      %p705 = pneg %p704
    $region46: #{conv_block_forward.1} parent=5 // pred_check_branch
      %707 = sbr.rel (%p705) target = $region48
    $region47: #{conv_block_forward.1} parent=5 // pred_region
      %s708 = ssub.s32 %s11, 2
      // Predicated region
      $region49: #{conv_block_forward.1} parent=47 // pred_check
        %p709 = pneg %p150
      $region50: #{conv_block_forward.1} parent=47 // pred_check_branch
        %711 = sbr.rel (%p709) target = $region52
      $region51: #{conv_block_forward.1} parent=47 // pred_region
        %p712 = scmp.lt.s32.totalorder %s17, 1
        %s713 = scalar_select %p712, %s17, 1
        %s714 = smul.addr %s713, 8
        %s715 = scalar_lea.vmem %s5, %s714
      $region52: #{conv_block_forward.1} parent=47 // pred_fallthru
        _
    $region48: #{conv_block_forward.1} parent=5 // pred_fallthru
      _
  $region6: #{conv_block_forward.1} parent=0 // loop_footer
    %s15 = sadd.s32 1, %s11
  $region7: #{conv_block_forward.1} parent=0 // loop_footer_branch
    %10 = sbr.rel target = $region3
  $region8: #{conv_block_forward.1} parent=0 // loop_exit
    _

</llo_original>
